<compile_context>
chip_gen: v7x
topology: tpu7x:2x2x1
jax: 0.10.0
libtpu: 0.0.40
codegen_flags: <defaults>
</compile_context>

<pallas_src>
from functools import partial

import jax
import jax.numpy as jnp
from jax import lax
from jax.experimental import pallas as pl
from jax.experimental.pallas import tpu as pltpu


def _conv_block_kernel(x_ref, xpos_ref, w1_ref, b1_ref, w2_ref, b2_ref,
                       o_ref, pf_ref, col_ref, *, H, W, K):
    """Fused ConvBlock for one batch element, channels-first, flat spatial.

    x_ref:    (1, Cin, H*W)          input activations
    xpos_ref: (1, H*W) int32         column index (x) of each flattened pixel
    w1_ref:   (Cmid, K*K*Cin)        conv1 weight with BN1 scale folded in
    b1_ref:   (Cmid, 1)              folded BN1 bias
    w2_ref:   (Cout, K*K*Cmid)       conv2 weight with BN2 scale folded in
    b2_ref:   (Cout, 1)              folded BN2 bias
    o_ref:    (1, Cout, H*W)         output
    pf_ref:   VMEM (Cmax, H*W + 2*(W+1))   flat zero-padded activation buffer
    col_ref:  VMEM (K*K*Cmax, H*W)         im2col slab (reused by both stages)
    """
    HW = H * W
    half = K // 2
    base = half * W + half            # interior offset in the flat pad buffer
    x_pos = xpos_ref[...]             # (1, HW) int32

    # Zero the whole flat-padded buffer once; the pad columns stay zero for
    # both stages (only the interior window is ever overwritten).
    pf_ref[...] = jnp.zeros_like(pf_ref)

    def conv_stage(src, w_ref, b_ref):
        """src: (C, HW) f32 -> 3x3 'same' conv (folded BN) as one matmul."""
        C = src.shape[0]
        # Write the activations into the interior of the flat padded buffer.
        pf_ref[0:C, base:base + HW] = src
        # Build the (K*K*C, HW) im2col slab from 9 static shifted slices.
        # Out-of-range rows (y direction) land in the zero pad; wrap-around
        # across row boundaries (x direction) is masked with x_pos.
        for dy in range(K):
            for dx in range(K):
                tap = dy * K + dx
                oy, ox = dy - half, dx - half
                start = base + oy * W + ox
                v = pf_ref[0:C, start:start + HW]
                if ox < 0:
                    v = jnp.where(x_pos >= -ox, v, 0.0)
                elif ox > 0:
                    v = jnp.where(x_pos < W - ox, v, 0.0)
                col_ref[tap * C:(tap + 1) * C, :] = v
        col = col_ref[0:K * K * C, :]                       # (K*K*C, HW)
        y = jnp.dot(w_ref[...], col,
                    preferred_element_type=jnp.float32)     # (C_out_stage, HW)
        return y + b_ref[...]

    x = x_ref[0].astype(jnp.float32)                        # (Cin, HW)
    y1 = conv_stage(x, w1_ref, b1_ref)                      # conv1 + BN1
    y1 = jnp.clip(y1, 0.0, 6.0)                             # ReLU6
    y2 = conv_stage(y1, w2_ref, b2_ref)                     # conv2 + BN2 (no act)
    o_ref[0] = y2.astype(o_ref.dtype)                       # lane-dense store


def _fold_bn(w_hwio, gamma, beta, mean, var, eps):
    """Fold BN (eval) scale into conv weights; return (Cout, K*K*Cin) + bias."""
    K, _, Cin, Cout = w_hwio.shape
    scale = gamma / jnp.sqrt(var + eps)
    w = (w_hwio * scale[None, None, None, :]).astype(jnp.float32)
    w = jnp.transpose(w, (3, 0, 1, 2)).reshape(Cout, K * K * Cin)  # rows: (dy,dx,cin)
    b = (beta - mean * scale).astype(jnp.float32).reshape(Cout, 1)
    return w, b


def conv_block(x_nchw, params, *, eps=1e-5):
    """ConvBlock forward. Input NCHW (PyTorch convention), output NCHW."""
    N, Cin, H, W = x_nchw.shape
    p1, p2 = params["conv1"], params["conv2"]
    K = p1["w"].shape[0]
    Cmid = p1["w"].shape[3]
    Cout = p2["w"].shape[3]
    HW = H * W
    half = K // 2
    Cmax = max(Cin, Cmid)
    L = HW + 2 * half * (W + 1)       # flat padded buffer length

    w1, b1 = _fold_bn(p1["w"], p1["gamma"], p1["beta"], p1["mean"], p1["var"], eps)
    w2, b2 = _fold_bn(p2["w"], p2["gamma"], p2["beta"], p2["mean"], p2["var"], eps)

    # Free (contiguous) reshape — no transposes, no HBM pad materialization.
    x_flat = x_nchw.reshape(N, Cin, HW)
    x_pos = (jnp.arange(HW, dtype=jnp.int32) % W).reshape(1, HW)

    kernel = partial(_conv_block_kernel, H=H, W=W, K=K)

    out_flat = pl.pallas_call(
        kernel,
        out_shape=jax.ShapeDtypeStruct((N, Cout, HW), x_nchw.dtype),
        grid=(N,),
        in_specs=[
            pl.BlockSpec((1, Cin, HW), lambda n: (n, 0, 0)),
            pl.BlockSpec((1, HW), lambda n: (0, 0)),
            pl.BlockSpec((Cmid, K * K * Cin), lambda n: (0, 0)),
            pl.BlockSpec((Cmid, 1), lambda n: (0, 0)),
            pl.BlockSpec((Cout, K * K * Cmid), lambda n: (0, 0)),
            pl.BlockSpec((Cout, 1), lambda n: (0, 0)),
        ],
        out_specs=pl.BlockSpec((1, Cout, HW), lambda n: (n, 0, 0)),
        scratch_shapes=[
            pltpu.VMEM((Cmax, L), jnp.float32),             # flat padded acts
            pltpu.VMEM((K * K * Cmax, HW), jnp.float32),    # im2col slab
        ],
        compiler_params=pltpu.CompilerParams(dimension_semantics=("parallel",)),
    )(x_flat, x_pos, w1, b1, w2, b2)

    return out_flat.reshape(N, Cout, H, W)


# ------------------------- pure-JAX reference ------------------------------

def _ref_conv_norm_act(x_nhwc, w_hwio, gamma, beta, mean, var, *, act, eps=1e-5):
    y = lax.conv_general_dilated(
        x_nhwc, w_hwio, window_strides=(1, 1), padding="SAME",
        dimension_numbers=("NHWC", "HWIO", "NHWC"))
    scale = gamma / jnp.sqrt(var + eps)
    y = y * scale + (beta - mean * scale)
    if act:
        y = jnp.clip(y, 0.0, 6.0)
    return y


def _ref_conv_block(x_nchw, params):
    x = jnp.transpose(x_nchw, (0, 2, 3, 1))
    p1, p2 = params["conv1"], params["conv2"]
    x = _ref_conv_norm_act(x, p1["w"], p1["gamma"], p1["beta"], p1["mean"], p1["var"], act=True)
    x = _ref_conv_norm_act(x, p2["w"], p2["gamma"], p2["beta"], p2["mean"], p2["var"], act=False)
    return jnp.transpose(x, (0, 3, 1, 2))


def _make_params(key, cin, cmid, cout, k=3):
    ks = jax.random.split(key, 10)
    def bn(kg, kb, km, kv, c):
        return dict(
            gamma=1.0 + 0.1 * jax.random.normal(kg, (c,), jnp.float32),
            beta=0.1 * jax.random.normal(kb, (c,), jnp.float32),
            mean=0.1 * jax.random.normal(km, (c,), jnp.float32),
            var=jnp.abs(jax.random.normal(kv, (c,), jnp.float32)) + 0.5,
        )
    conv1 = dict(w=0.2 * jax.random.normal(ks[0], (k, k, cin, cmid), jnp.float32),
                 **bn(ks[1], ks[2], ks[3], ks[4], cmid))
    conv2 = dict(w=0.2 * jax.random.normal(ks[5], (k, k, cmid, cout), jnp.float32),
                 **bn(ks[6], ks[7], ks[8], ks[9], cout))
    return {"conv1": conv1, "conv2": conv2}


if __name__ == "__main__":
    key = jax.random.PRNGKey(0)
    k_x, k_p = jax.random.split(key)

    # Small shapes: ConvBlock(in=4, out=4), expand_ratio=1 -> mid=4.
    N, Cin, H, W = 2, 4, 16, 16
    Cmid, Cout = 4, 4

    x = jax.random.normal(k_x, (N, Cin, H, W), jnp.float32)  # NCHW (PyTorch-style)
    params = _make_params(k_p, Cin, Cmid, Cout)

    out = conv_block(x, params)
    out = jax.block_until_ready(out)

    ref = _ref_conv_block(x, params)
    assert out.shape == (N, Cout, H, W)
    err = float(jnp.max(jnp.abs(out - ref)))
    assert jnp.allclose(out, ref, atol=2e-4, rtol=2e-4), err

    print("KERNEL_OK")
</pallas_src>

<mosaic_0001>
module attributes {stable_mosaic.version = 11 : i64} {
  func.func @_conv_block_kernel(%arg0: i32, %arg1: memref<1x4x256xf32, #tpu.memory_space<vmem>>, %arg2: memref<1x256xi32, #tpu.memory_space<vmem>>, %arg3: memref<4x36xf32, #tpu.memory_space<vmem>>, %arg4: memref<4x1xf32, #tpu.memory_space<vmem>>, %arg5: memref<4x36xf32, #tpu.memory_space<vmem>>, %arg6: memref<4x1xf32, #tpu.memory_space<vmem>>, %arg7: memref<1x4x256xf32, #tpu.memory_space<vmem>>, %arg8: memref<4x290xf32, #tpu.memory_space<vmem>>, %arg9: memref<36x256xf32, #tpu.memory_space<vmem>>) attributes {dimension_semantics = [#tpu.dimension_semantics<parallel>], iteration_bounds = array<i64: 2>, scalar_prefetch = 0 : i64, scratch_operands = 2 : i64, tpu.core_type = #tpu.core_type<tc>, window_params = [{transform_indices = @transform_0, window_bounds = array<i64: 1, 4, 256>}, {pipeline_mode = #tpu.pipeline_mode<synchronous>, transform_indices = @transform_1, window_bounds = array<i64: 1, 256>}, {pipeline_mode = #tpu.pipeline_mode<synchronous>, transform_indices = @transform_2, window_bounds = array<i64: 4, 36>}, {pipeline_mode = #tpu.pipeline_mode<synchronous>, transform_indices = @transform_3, window_bounds = array<i64: 4, 1>}, {pipeline_mode = #tpu.pipeline_mode<synchronous>, transform_indices = @transform_4, window_bounds = array<i64: 4, 36>}, {pipeline_mode = #tpu.pipeline_mode<synchronous>, transform_indices = @transform_5, window_bounds = array<i64: 4, 1>}, {transform_indices = @transform_6, window_bounds = array<i64: 1, 4, 256>}]} {
    %c0 = arith.constant 0 : index
    %c0_0 = arith.constant 0 : index
    %0 = vector.load %arg2[%c0, %c0_0] : memref<1x256xi32, #tpu.memory_space<vmem>>, vector<1x256xi32>
    %cst = arith.constant 0.000000e+00 : f32
    %1 = vector.broadcast %cst : f32 to vector<4x290xf32>
    %c0_1 = arith.constant 0 : index
    %c0_2 = arith.constant 0 : index
    %2 = vector.load %arg8[%c0_1, %c0_2] : memref<4x290xf32, #tpu.memory_space<vmem>>, vector<4x290xf32>
    tpu.vector_store %arg8[%c0_1, %c0_2], %1 {strides = array<i32>} : memref<4x290xf32, #tpu.memory_space<vmem>>, vector<4x290xf32>,
    %c0_3 = arith.constant 0 : index
    %c0_4 = arith.constant 0 : index
    %c0_5 = arith.constant 0 : index
    %3 = vector.load %arg1[%c0_3, %c0_4, %c0_5] : memref<1x4x256xf32, #tpu.memory_space<vmem>>, vector<1x4x256xf32>
    %4 = vector.shape_cast %3 : vector<1x4x256xf32> to vector<4x256xf32>
    %c0_6 = arith.constant 0 : index
    %c17 = arith.constant 17 : index
    %5 = vector.load %arg8[%c0_6, %c17] : memref<4x290xf32, #tpu.memory_space<vmem>>, vector<4x256xf32>
    tpu.vector_store %arg8[%c0_6, %c17], %4 {strides = array<i32>} : memref<4x290xf32, #tpu.memory_space<vmem>>, vector<4x256xf32>,
    %c0_7 = arith.constant 0 : index
    %c0_8 = arith.constant 0 : index
    %6 = vector.load %arg8[%c0_7, %c0_8] : memref<4x290xf32, #tpu.memory_space<vmem>>, vector<4x256xf32>
    %c1_i32 = arith.constant 1 : i32
    %7 = vector.broadcast %c1_i32 : i32 to vector<1x256xi32>
    %8 = arith.cmpi sge, %0, %7 : vector<1x256xi32>
    %cst_9 = arith.constant 0.000000e+00 : f32
    %9 = vector.shape_cast %8 : vector<1x256xi1> to vector<1x256xi1>
    %10 = vector.broadcast %9 : vector<1x256xi1> to vector<4x256xi1>
    %11 = vector.broadcast %cst_9 : f32 to vector<4x256xf32>
    %12 = arith.select %10, %6, %11 : vector<4x256xi1>, vector<4x256xf32>
    %c0_10 = arith.constant 0 : index
    %c0_11 = arith.constant 0 : index
    %13 = vector.load %arg9[%c0_10, %c0_11] : memref<36x256xf32, #tpu.memory_space<vmem>>, vector<4x256xf32>
    tpu.vector_store %arg9[%c0_10, %c0_11], %12 {strides = array<i32>} : memref<36x256xf32, #tpu.memory_space<vmem>>, vector<4x256xf32>,
    %c0_12 = arith.constant 0 : index
    %c1 = arith.constant 1 : index
    %14 = vector.load %arg8[%c0_12, %c1] : memref<4x290xf32, #tpu.memory_space<vmem>>, vector<4x256xf32>
    %c4 = arith.constant 4 : index
    %c0_13 = arith.constant 0 : index
    %15 = vector.load %arg9[%c4, %c0_13] : memref<36x256xf32, #tpu.memory_space<vmem>>, vector<4x256xf32>
    tpu.vector_store %arg9[%c4, %c0_13], %14 {strides = array<i32>} : memref<36x256xf32, #tpu.memory_space<vmem>>, vector<4x256xf32>,
    %c0_14 = arith.constant 0 : index
    %c2 = arith.constant 2 : index
    %16 = vector.load %arg8[%c0_14, %c2] : memref<4x290xf32, #tpu.memory_space<vmem>>, vector<4x256xf32>
    %c15_i32 = arith.constant 15 : i32
    %17 = vector.broadcast %c15_i32 : i32 to vector<1x256xi32>
    %18 = arith.cmpi slt, %0, %17 : vector<1x256xi32>
    %cst_15 = arith.constant 0.000000e+00 : f32
    %19 = vector.shape_cast %18 : vector<1x256xi1> to vector<1x256xi1>
    %20 = vector.broadcast %19 : vector<1x256xi1> to vector<4x256xi1>
    %21 = vector.broadcast %cst_15 : f32 to vector<4x256xf32>
    %22 = arith.select %20, %16, %21 : vector<4x256xi1>, vector<4x256xf32>
    %c8 = arith.constant 8 : index
    %c0_16 = arith.constant 0 : index
    %23 = vector.load %arg9[%c8, %c0_16] : memref<36x256xf32, #tpu.memory_space<vmem>>, vector<4x256xf32>
    tpu.vector_store %arg9[%c8, %c0_16], %22 {strides = array<i32>} : memref<36x256xf32, #tpu.memory_space<vmem>>, vector<4x256xf32>,
    %c0_17 = arith.constant 0 : index
    %c16 = arith.constant 16 : index
    %24 = vector.load %arg8[%c0_17, %c16] : memref<4x290xf32, #tpu.memory_space<vmem>>, vector<4x256xf32>
    %c1_i32_18 = arith.constant 1 : i32
    %25 = vector.broadcast %c1_i32_18 : i32 to vector<1x256xi32>
    %26 = arith.cmpi sge, %0, %25 : vector<1x256xi32>
    %cst_19 = arith.constant 0.000000e+00 : f32
    %27 = vector.shape_cast %26 : vector<1x256xi1> to vector<1x256xi1>
    %28 = vector.broadcast %27 : vector<1x256xi1> to vector<4x256xi1>
    %29 = vector.broadcast %cst_19 : f32 to vector<4x256xf32>
    %30 = arith.select %28, %24, %29 : vector<4x256xi1>, vector<4x256xf32>
    %c12 = arith.constant 12 : index
    %c0_20 = arith.constant 0 : index
    %31 = vector.load %arg9[%c12, %c0_20] : memref<36x256xf32, #tpu.memory_space<vmem>>, vector<4x256xf32>
    tpu.vector_store %arg9[%c12, %c0_20], %30 {strides = array<i32>} : memref<36x256xf32, #tpu.memory_space<vmem>>, vector<4x256xf32>,
    %c0_21 = arith.constant 0 : index
    %c17_22 = arith.constant 17 : index
    %32 = vector.load %arg8[%c0_21, %c17_22] : memref<4x290xf32, #tpu.memory_space<vmem>>, vector<4x256xf32>
    %c16_23 = arith.constant 16 : index
    %c0_24 = arith.constant 0 : index
    %33 = vector.load %arg9[%c16_23, %c0_24] : memref<36x256xf32, #tpu.memory_space<vmem>>, vector<4x256xf32>
    tpu.vector_store %arg9[%c16_23, %c0_24], %32 {strides = array<i32>} : memref<36x256xf32, #tpu.memory_space<vmem>>, vector<4x256xf32>,
    %c0_25 = arith.constant 0 : index
    %c18 = arith.constant 18 : index
    %34 = vector.load %arg8[%c0_25, %c18] : memref<4x290xf32, #tpu.memory_space<vmem>>, vector<4x256xf32>
    %c15_i32_26 = arith.constant 15 : i32
    %35 = vector.broadcast %c15_i32_26 : i32 to vector<1x256xi32>
    %36 = arith.cmpi slt, %0, %35 : vector<1x256xi32>
    %cst_27 = arith.constant 0.000000e+00 : f32
    %37 = vector.shape_cast %36 : vector<1x256xi1> to vector<1x256xi1>
    %38 = vector.broadcast %37 : vector<1x256xi1> to vector<4x256xi1>
    %39 = vector.broadcast %cst_27 : f32 to vector<4x256xf32>
    %40 = arith.select %38, %34, %39 : vector<4x256xi1>, vector<4x256xf32>
    %c20 = arith.constant 20 : index
    %c0_28 = arith.constant 0 : index
    %41 = vector.load %arg9[%c20, %c0_28] : memref<36x256xf32, #tpu.memory_space<vmem>>, vector<4x256xf32>
    tpu.vector_store %arg9[%c20, %c0_28], %40 {strides = array<i32>} : memref<36x256xf32, #tpu.memory_space<vmem>>, vector<4x256xf32>,
    %c0_29 = arith.constant 0 : index
    %c32 = arith.constant 32 : index
    %42 = vector.load %arg8[%c0_29, %c32] : memref<4x290xf32, #tpu.memory_space<vmem>>, vector<4x256xf32>
    %c1_i32_30 = arith.constant 1 : i32
    %43 = vector.broadcast %c1_i32_30 : i32 to vector<1x256xi32>
    %44 = arith.cmpi sge, %0, %43 : vector<1x256xi32>
    %cst_31 = arith.constant 0.000000e+00 : f32
    %45 = vector.shape_cast %44 : vector<1x256xi1> to vector<1x256xi1>
    %46 = vector.broadcast %45 : vector<1x256xi1> to vector<4x256xi1>
    %47 = vector.broadcast %cst_31 : f32 to vector<4x256xf32>
    %48 = arith.select %46, %42, %47 : vector<4x256xi1>, vector<4x256xf32>
    %c24 = arith.constant 24 : index
    %c0_32 = arith.constant 0 : index
    %49 = vector.load %arg9[%c24, %c0_32] : memref<36x256xf32, #tpu.memory_space<vmem>>, vector<4x256xf32>
    tpu.vector_store %arg9[%c24, %c0_32], %48 {strides = array<i32>} : memref<36x256xf32, #tpu.memory_space<vmem>>, vector<4x256xf32>,
    %c0_33 = arith.constant 0 : index
    %c33 = arith.constant 33 : index
    %50 = vector.load %arg8[%c0_33, %c33] : memref<4x290xf32, #tpu.memory_space<vmem>>, vector<4x256xf32>
    %c28 = arith.constant 28 : index
    %c0_34 = arith.constant 0 : index
    %51 = vector.load %arg9[%c28, %c0_34] : memref<36x256xf32, #tpu.memory_space<vmem>>, vector<4x256xf32>
    tpu.vector_store %arg9[%c28, %c0_34], %50 {strides = array<i32>} : memref<36x256xf32, #tpu.memory_space<vmem>>, vector<4x256xf32>,
    %c0_35 = arith.constant 0 : index
    %c34 = arith.constant 34 : index
    %52 = vector.load %arg8[%c0_35, %c34] : memref<4x290xf32, #tpu.memory_space<vmem>>, vector<4x256xf32>
    %c15_i32_36 = arith.constant 15 : i32
    %53 = vector.broadcast %c15_i32_36 : i32 to vector<1x256xi32>
    %54 = arith.cmpi slt, %0, %53 : vector<1x256xi32>
    %cst_37 = arith.constant 0.000000e+00 : f32
    %55 = vector.shape_cast %54 : vector<1x256xi1> to vector<1x256xi1>
    %56 = vector.broadcast %55 : vector<1x256xi1> to vector<4x256xi1>
    %57 = vector.broadcast %cst_37 : f32 to vector<4x256xf32>
    %58 = arith.select %56, %52, %57 : vector<4x256xi1>, vector<4x256xf32>
    %c32_38 = arith.constant 32 : index
    %c0_39 = arith.constant 0 : index
    %59 = vector.load %arg9[%c32_38, %c0_39] : memref<36x256xf32, #tpu.memory_space<vmem>>, vector<4x256xf32>
    tpu.vector_store %arg9[%c32_38, %c0_39], %58 {strides = array<i32>} : memref<36x256xf32, #tpu.memory_space<vmem>>, vector<4x256xf32>,
    %c0_40 = arith.constant 0 : index
    %c0_41 = arith.constant 0 : index
    %60 = vector.load %arg9[%c0_40, %c0_41] : memref<36x256xf32, #tpu.memory_space<vmem>>, vector<36x256xf32>
    %c0_42 = arith.constant 0 : index
    %c0_43 = arith.constant 0 : index
    %61 = vector.load %arg3[%c0_42, %c0_43] : memref<4x36xf32, #tpu.memory_space<vmem>>, vector<4x36xf32>
    %cst_44 = arith.constant dense<0.000000e+00> : vector<4x256xf32>
    %62 = tpu.matmul %61, %60, %cst_44 {dimension_numbers = #tpu.dot_dimension_numbers<[1], [0], [0], [1], [0, 0, 1, 1], [], []>} : vector<4x36xf32>, vector<36x256xf32>, vector<4x256xf32> -> vector<4x256xf32>
    %c0_45 = arith.constant 0 : index
    %c0_46 = arith.constant 0 : index
    %63 = vector.load %arg4[%c0_45, %c0_46] : memref<4x1xf32, #tpu.memory_space<vmem>>, vector<4x1xf32>
    %64 = vector.broadcast %63 : vector<4x1xf32> to vector<4x256xf32>
    %65 = arith.addf %62, %64 : vector<4x256xf32>
    %cst_47 = arith.constant 0.000000e+00 : f32
    %cst_48 = arith.constant 6.000000e+00 : f32
    %66 = vector.broadcast %cst_47 : f32 to vector<4x256xf32>
    %67 = arith.maximumf %66, %65 : vector<4x256xf32>
    %68 = vector.broadcast %cst_48 : f32 to vector<4x256xf32>
    %69 = arith.minimumf %68, %67 : vector<4x256xf32>
    %c0_49 = arith.constant 0 : index
    %c17_50 = arith.constant 17 : index
    %70 = vector.load %arg8[%c0_49, %c17_50] : memref<4x290xf32, #tpu.memory_space<vmem>>, vector<4x256xf32>
    tpu.vector_store %arg8[%c0_49, %c17_50], %69 {strides = array<i32>} : memref<4x290xf32, #tpu.memory_space<vmem>>, vector<4x256xf32>,
    %c0_51 = arith.constant 0 : index
    %c0_52 = arith.constant 0 : index
    %71 = vector.load %arg8[%c0_51, %c0_52] : memref<4x290xf32, #tpu.memory_space<vmem>>, vector<4x256xf32>
    %c1_i32_53 = arith.constant 1 : i32
    %72 = vector.broadcast %c1_i32_53 : i32 to vector<1x256xi32>
    %73 = arith.cmpi sge, %0, %72 : vector<1x256xi32>
    %cst_54 = arith.constant 0.000000e+00 : f32
    %74 = vector.shape_cast %73 : vector<1x256xi1> to vector<1x256xi1>
    %75 = vector.broadcast %74 : vector<1x256xi1> to vector<4x256xi1>
    %76 = vector.broadcast %cst_54 : f32 to vector<4x256xf32>
    %77 = arith.select %75, %71, %76 : vector<4x256xi1>, vector<4x256xf32>
    %c0_55 = arith.constant 0 : index
    %c0_56 = arith.constant 0 : index
    %78 = vector.load %arg9[%c0_55, %c0_56] : memref<36x256xf32, #tpu.memory_space<vmem>>, vector<4x256xf32>
    tpu.vector_store %arg9[%c0_55, %c0_56], %77 {strides = array<i32>} : memref<36x256xf32, #tpu.memory_space<vmem>>, vector<4x256xf32>,
    %c0_57 = arith.constant 0 : index
    %c1_58 = arith.constant 1 : index
    %79 = vector.load %arg8[%c0_57, %c1_58] : memref<4x290xf32, #tpu.memory_space<vmem>>, vector<4x256xf32>
    %c4_59 = arith.constant 4 : index
    %c0_60 = arith.constant 0 : index
    %80 = vector.load %arg9[%c4_59, %c0_60] : memref<36x256xf32, #tpu.memory_space<vmem>>, vector<4x256xf32>
    tpu.vector_store %arg9[%c4_59, %c0_60], %79 {strides = array<i32>} : memref<36x256xf32, #tpu.memory_space<vmem>>, vector<4x256xf32>,
    %c0_61 = arith.constant 0 : index
    %c2_62 = arith.constant 2 : index
    %81 = vector.load %arg8[%c0_61, %c2_62] : memref<4x290xf32, #tpu.memory_space<vmem>>, vector<4x256xf32>
    %c15_i32_63 = arith.constant 15 : i32
    %82 = vector.broadcast %c15_i32_63 : i32 to vector<1x256xi32>
    %83 = arith.cmpi slt, %0, %82 : vector<1x256xi32>
    %cst_64 = arith.constant 0.000000e+00 : f32
    %84 = vector.shape_cast %83 : vector<1x256xi1> to vector<1x256xi1>
    %85 = vector.broadcast %84 : vector<1x256xi1> to vector<4x256xi1>
    %86 = vector.broadcast %cst_64 : f32 to vector<4x256xf32>
    %87 = arith.select %85, %81, %86 : vector<4x256xi1>, vector<4x256xf32>
    %c8_65 = arith.constant 8 : index
    %c0_66 = arith.constant 0 : index
    %88 = vector.load %arg9[%c8_65, %c0_66] : memref<36x256xf32, #tpu.memory_space<vmem>>, vector<4x256xf32>
    tpu.vector_store %arg9[%c8_65, %c0_66], %87 {strides = array<i32>} : memref<36x256xf32, #tpu.memory_space<vmem>>, vector<4x256xf32>,
    %c0_67 = arith.constant 0 : index
    %c16_68 = arith.constant 16 : index
    %89 = vector.load %arg8[%c0_67, %c16_68] : memref<4x290xf32, #tpu.memory_space<vmem>>, vector<4x256xf32>
    %c1_i32_69 = arith.constant 1 : i32
    %90 = vector.broadcast %c1_i32_69 : i32 to vector<1x256xi32>
    %91 = arith.cmpi sge, %0, %90 : vector<1x256xi32>
    %cst_70 = arith.constant 0.000000e+00 : f32
    %92 = vector.shape_cast %91 : vector<1x256xi1> to vector<1x256xi1>
    %93 = vector.broadcast %92 : vector<1x256xi1> to vector<4x256xi1>
    %94 = vector.broadcast %cst_70 : f32 to vector<4x256xf32>
    %95 = arith.select %93, %89, %94 : vector<4x256xi1>, vector<4x256xf32>
    %c12_71 = arith.constant 12 : index
    %c0_72 = arith.constant 0 : index
    %96 = vector.load %arg9[%c12_71, %c0_72] : memref<36x256xf32, #tpu.memory_space<vmem>>, vector<4x256xf32>
    tpu.vector_store %arg9[%c12_71, %c0_72], %95 {strides = array<i32>} : memref<36x256xf32, #tpu.memory_space<vmem>>, vector<4x256xf32>,
    %c0_73 = arith.constant 0 : index
    %c17_74 = arith.constant 17 : index
    %97 = vector.load %arg8[%c0_73, %c17_74] : memref<4x290xf32, #tpu.memory_space<vmem>>, vector<4x256xf32>
    %c16_75 = arith.constant 16 : index
    %c0_76 = arith.constant 0 : index
    %98 = vector.load %arg9[%c16_75, %c0_76] : memref<36x256xf32, #tpu.memory_space<vmem>>, vector<4x256xf32>
    tpu.vector_store %arg9[%c16_75, %c0_76], %97 {strides = array<i32>} : memref<36x256xf32, #tpu.memory_space<vmem>>, vector<4x256xf32>,
    %c0_77 = arith.constant 0 : index
    %c18_78 = arith.constant 18 : index
    %99 = vector.load %arg8[%c0_77, %c18_78] : memref<4x290xf32, #tpu.memory_space<vmem>>, vector<4x256xf32>
    %c15_i32_79 = arith.constant 15 : i32
    %100 = vector.broadcast %c15_i32_79 : i32 to vector<1x256xi32>
    %101 = arith.cmpi slt, %0, %100 : vector<1x256xi32>
    %cst_80 = arith.constant 0.000000e+00 : f32
    %102 = vector.shape_cast %101 : vector<1x256xi1> to vector<1x256xi1>
    %103 = vector.broadcast %102 : vector<1x256xi1> to vector<4x256xi1>
    %104 = vector.broadcast %cst_80 : f32 to vector<4x256xf32>
    %105 = arith.select %103, %99, %104 : vector<4x256xi1>, vector<4x256xf32>
    %c20_81 = arith.constant 20 : index
    %c0_82 = arith.constant 0 : index
    %106 = vector.load %arg9[%c20_81, %c0_82] : memref<36x256xf32, #tpu.memory_space<vmem>>, vector<4x256xf32>
    tpu.vector_store %arg9[%c20_81, %c0_82], %105 {strides = array<i32>} : memref<36x256xf32, #tpu.memory_space<vmem>>, vector<4x256xf32>,
    %c0_83 = arith.constant 0 : index
    %c32_84 = arith.constant 32 : index
    %107 = vector.load %arg8[%c0_83, %c32_84] : memref<4x290xf32, #tpu.memory_space<vmem>>, vector<4x256xf32>
    %c1_i32_85 = arith.constant 1 : i32
    %108 = vector.broadcast %c1_i32_85 : i32 to vector<1x256xi32>
    %109 = arith.cmpi sge, %0, %108 : vector<1x256xi32>
    %cst_86 = arith.constant 0.000000e+00 : f32
    %110 = vector.shape_cast %109 : vector<1x256xi1> to vector<1x256xi1>
    %111 = vector.broadcast %110 : vector<1x256xi1> to vector<4x256xi1>
    %112 = vector.broadcast %cst_86 : f32 to vector<4x256xf32>
    %113 = arith.select %111, %107, %112 : vector<4x256xi1>, vector<4x256xf32>
    %c24_87 = arith.constant 24 : index
    %c0_88 = arith.constant 0 : index
    %114 = vector.load %arg9[%c24_87, %c0_88] : memref<36x256xf32, #tpu.memory_space<vmem>>, vector<4x256xf32>
    tpu.vector_store %arg9[%c24_87, %c0_88], %113 {strides = array<i32>} : memref<36x256xf32, #tpu.memory_space<vmem>>, vector<4x256xf32>,
    %c0_89 = arith.constant 0 : index
    %c33_90 = arith.constant 33 : index
    %115 = vector.load %arg8[%c0_89, %c33_90] : memref<4x290xf32, #tpu.memory_space<vmem>>, vector<4x256xf32>
    %c28_91 = arith.constant 28 : index
    %c0_92 = arith.constant 0 : index
    %116 = vector.load %arg9[%c28_91, %c0_92] : memref<36x256xf32, #tpu.memory_space<vmem>>, vector<4x256xf32>
    tpu.vector_store %arg9[%c28_91, %c0_92], %115 {strides = array<i32>} : memref<36x256xf32, #tpu.memory_space<vmem>>, vector<4x256xf32>,
    %c0_93 = arith.constant 0 : index
    %c34_94 = arith.constant 34 : index
    %117 = vector.load %arg8[%c0_93, %c34_94] : memref<4x290xf32, #tpu.memory_space<vmem>>, vector<4x256xf32>
    %c15_i32_95 = arith.constant 15 : i32
    %118 = vector.broadcast %c15_i32_95 : i32 to vector<1x256xi32>
    %119 = arith.cmpi slt, %0, %118 : vector<1x256xi32>
    %cst_96 = arith.constant 0.000000e+00 : f32
    %120 = vector.shape_cast %119 : vector<1x256xi1> to vector<1x256xi1>
    %121 = vector.broadcast %120 : vector<1x256xi1> to vector<4x256xi1>
    %122 = vector.broadcast %cst_96 : f32 to vector<4x256xf32>
    %123 = arith.select %121, %117, %122 : vector<4x256xi1>, vector<4x256xf32>
    %c32_97 = arith.constant 32 : index
    %c0_98 = arith.constant 0 : index
    %124 = vector.load %arg9[%c32_97, %c0_98] : memref<36x256xf32, #tpu.memory_space<vmem>>, vector<4x256xf32>
    tpu.vector_store %arg9[%c32_97, %c0_98], %123 {strides = array<i32>} : memref<36x256xf32, #tpu.memory_space<vmem>>, vector<4x256xf32>,
    %c0_99 = arith.constant 0 : index
    %c0_100 = arith.constant 0 : index
    %125 = vector.load %arg9[%c0_99, %c0_100] : memref<36x256xf32, #tpu.memory_space<vmem>>, vector<36x256xf32>
    %c0_101 = arith.constant 0 : index
    %c0_102 = arith.constant 0 : index
    %126 = vector.load %arg5[%c0_101, %c0_102] : memref<4x36xf32, #tpu.memory_space<vmem>>, vector<4x36xf32>
    %cst_103 = arith.constant dense<0.000000e+00> : vector<4x256xf32>
    %127 = tpu.matmul %126, %125, %cst_103 {dimension_numbers = #tpu.dot_dimension_numbers<[1], [0], [0], [1], [0, 0, 1, 1], [], []>} : vector<4x36xf32>, vector<36x256xf32>, vector<4x256xf32> -> vector<4x256xf32>
    %c0_104 = arith.constant 0 : index
    %c0_105 = arith.constant 0 : index
    %128 = vector.load %arg6[%c0_104, %c0_105] : memref<4x1xf32, #tpu.memory_space<vmem>>, vector<4x1xf32>
    %129 = vector.broadcast %128 : vector<4x1xf32> to vector<4x256xf32>
    %130 = arith.addf %127, %129 : vector<4x256xf32>
    %c0_106 = arith.constant 0 : index
    %c0_107 = arith.constant 0 : index
    %c0_108 = arith.constant 0 : index
    %131 = vector.load %arg7[%c0_106, %c0_107, %c0_108] : memref<1x4x256xf32, #tpu.memory_space<vmem>>, vector<1x4x256xf32>
    %132 = vector.shape_cast %131 : vector<1x4x256xf32> to vector<4x256xf32>
    %133 = vector.shape_cast %130 : vector<4x256xf32> to vector<1x4x256xf32>
    tpu.vector_store %arg7[%c0_106, %c0_107, %c0_108], %133 {strides = array<i32>} : memref<1x4x256xf32, #tpu.memory_space<vmem>>, vector<1x4x256xf32>,
    return
  }
  func.func @transform_0(%arg0: i32) -> (i32, i32, i32) {
    %c0_i32 = arith.constant 0 : i32
    %c0_i32_0 = arith.constant 0 : i32
    %c0_i32_1 = arith.constant 0 : i32
    return %arg0, %c0_i32, %c0_i32_0 : i32, i32, i32
  }
  func.func @transform_1(%arg0: i32) -> (i32, i32) {
    %c0_i32 = arith.constant 0 : i32
    %c0_i32_0 = arith.constant 0 : i32
    %c0_i32_1 = arith.constant 0 : i32
    return %c0_i32, %c0_i32_0 : i32, i32
  }
  func.func @transform_2(%arg0: i32) -> (i32, i32) {
    %c0_i32 = arith.constant 0 : i32
    %c0_i32_0 = arith.constant 0 : i32
    %c0_i32_1 = arith.constant 0 : i32
    return %c0_i32, %c0_i32_0 : i32, i32
  }
  func.func @transform_3(%arg0: i32) -> (i32, i32) {
    %c0_i32 = arith.constant 0 : i32
    %c0_i32_0 = arith.constant 0 : i32
    %c0_i32_1 = arith.constant 0 : i32
    return %c0_i32, %c0_i32_0 : i32, i32
  }
  func.func @transform_4(%arg0: i32) -> (i32, i32) {
    %c0_i32 = arith.constant 0 : i32
    %c0_i32_0 = arith.constant 0 : i32
    %c0_i32_1 = arith.constant 0 : i32
    return %c0_i32, %c0_i32_0 : i32, i32
  }
  func.func @transform_5(%arg0: i32) -> (i32, i32) {
    %c0_i32 = arith.constant 0 : i32
    %c0_i32_0 = arith.constant 0 : i32
    %c0_i32_1 = arith.constant 0 : i32
    return %c0_i32, %c0_i32_0 : i32, i32
  }
  func.func @transform_6(%arg0: i32) -> (i32, i32, i32) {
    %c0_i32 = arith.constant 0 : i32
    %c0_i32_0 = arith.constant 0 : i32
    %c0_i32_1 = arith.constant 0 : i32
    return %arg0, %c0_i32, %c0_i32_0 : i32, i32, i32
  }
}

</mosaic_0001>

<llo_original>
// kernel: tpu_custom_call.1
$region0: #{tpu_custom_call.1}
  #allocation0 [shape = 'u32[]', space=smem, size = 0x4, offset = 0x4, fixed_abs, tag = 'smem constant byte address 0x4 - core index']
  #allocation1 [shape = 'u32[144,128]{1,0:T(1,128)}', space=vmem, size = 0x12000, scoped, tag = 'internal scratch']
  #allocation2 [shape = 'f32[4,290]{1,0:T(4,128)}', space=vmem, size = 0x1800, scoped, tag = 'scratch operand']
  #allocation3 [shape = 'f32[36,256]{1,0:T(8,128)}', space=vmem, size = 0xa000, scoped, tag = 'scratch operand']
  %s0 = inlined_call_operand.hbm [shape: f32[2,4,256], index: 0, kind: input, shape index: {}]
  %s1 = inlined_call_operand.vmem [shape: s32[1,256], index: 1, kind: input, shape index: {}]
  %s2 = inlined_call_operand.vmem [shape: f32[4,36], index: 2, kind: input, shape index: {}]
  %s3 = inlined_call_operand.vmem [shape: f32[4,1], index: 3, kind: input, shape index: {}]
  %s4 = inlined_call_operand.vmem [shape: f32[4,36], index: 4, kind: input, shape index: {}]
  %s5 = inlined_call_operand.vmem [shape: f32[4,1], index: 5, kind: input, shape index: {}]
  %s6 = inlined_call_operand.hbm [shape: f32[2,4,256], index: 6, kind: output, shape index: {}]
  %s7 = sld [smem:[#allocation0]]
  $region61: #{tpu_custom_call.1} parent=0
    _
  %s9 = ssub.s32 1, %s7
  %s10 = scalar_select 0, %s9, %s7
  $region1: #{tpu_custom_call.1} parent=0
    #allocation4 [shape = 'u8[8192]{0}', space=vmem, size = 0x2000, scoped, tag = 'input window, operand 0']
    #allocation5 [shape = 's32[2]{0}', space=sflag, size = 0x8, scoped, tag = 'scoped memory for tpu_custom_call.1']
    #allocation6 [shape = 's32[2]{0}', space=sflag, size = 0x8, scoped, tag = 'scoped memory for tpu_custom_call.1']
    #allocation7 [shape = 'u8[8192]{0}', space=vmem, size = 0x2000, scoped, tag = 'output window, operand 0']
    %11 = vsyncpa [#allocation5], 0
    %s12 = scalar_lea.sflag [#allocation5], 1
    %13 = vsyncpa %s12, 0
    %14 = vsyncpa [#allocation6], 0
    %s15 = scalar_lea.sflag [#allocation6], 1
    %16 = vsyncpa %s15, 0
    loop: start=0, step=1, limit=4
    $region2: #{tpu_custom_call.1} parent=1 // loop_pre_header
      _
    $region3: #{tpu_custom_call.1} parent=1 // loop_header
      %s18 = sphi 0, %s22
      %p19 = scmp.ge.s32.totalorder %s18, 4
      %s28 = sphi 0, %s30
      %s31 = sphi 0, %s28
      %s32 = sphi 0, %s31
      %s48 = sphi 0, %s32
      %s52 = sphi 0, %s52
      %s54 = sphi 0, %s52
      %s55 = sphi 0, %s54
      %s69 = sphi 0, %s55
      %s73 = sphi 0, %s73
      %s75 = sphi 0, %s73
      %s76 = sphi 0, %s75
      %s90 = sphi 0, %s76
      %s94 = sphi 0, %s94
      %s96 = sphi 0, %s94
      %s97 = sphi 0, %s96
      %s111 = sphi 0, %s97
      %s115 = sphi 0, %s115
      %s117 = sphi 0, %s115
      %s118 = sphi 0, %s117
      %s132 = sphi 0, %s118
      %s136 = sphi 0, %s136
      %s138 = sphi 0, %s136
      %s139 = sphi 0, %s138
      %s153 = sphi 0, %s139
      %s159 = sphi 0, %s161
      %s162 = sphi 0, %s159
      %s163 = sphi 0, %s162
      %s179 = sphi 0, %s163
    $region4: #{tpu_custom_call.1} parent=1 // loop_header_branch
      %21 = sbr.rel (%p19) target = $region8
    $region5: #{tpu_custom_call.1} parent=1 // loop_body
      %s23 = ssub.s32 %s18, 1
      %s24 = ssub.s32 %s18, 2
      %s25 = sadd.s32 %s18, 1
      %s26 = ssub.s32 %s18, %s25
      %p27 = scmp.eq.s32.totalorder %s26, 0
      %s29 = sadd.s32 %s28, 1
      %s30 = scalar_select %p27, %s28, %s29
      %p33 = pneg %p27
      %p34 = scmp.eq.s32.totalorder %s18, 1
      %p35 = por %p33, %p34
      %p36 = scmp.ne.s32.totalorder %s28, %s31
      %p37 = scmp.eq.s32.totalorder %s18, 0
      %p38 = por %p36, %p37
      %p39 = scmp.ne.s32.totalorder %s28, %s31
      %p40 = scmp.eq.s32.totalorder %s23, 1
      %p41 = por %p39, %p40
      %p42 = scmp.ne.s32.totalorder %s31, %s32
      %p43 = scmp.eq.s32.totalorder %s23, 0
      %p44 = por %p42, %p43
      %p45 = scmp.ne.s32.totalorder %s31, %s32
      %p46 = scmp.eq.s32.totalorder %s24, 1
      %p47 = por %p45, %p46
      %p49 = scmp.ne.s32.totalorder %s32, %s48
      %p50 = scmp.eq.s32.totalorder %s24, 0
      %p51 = por %p49, %p50
      %s53 = sadd.s32 %s52, 1
      %p56 = scmp.eq.s32.totalorder %s18, 1
      %p57 = scmp.ne.s32.totalorder %s52, %s54
      %p58 = scmp.eq.s32.totalorder %s18, 0
      %p59 = por %p57, %p58
      %p60 = scmp.ne.s32.totalorder %s52, %s54
      %p61 = scmp.eq.s32.totalorder %s23, 1
      %p62 = por %p60, %p61
      %p63 = scmp.ne.s32.totalorder %s54, %s55
      %p64 = scmp.eq.s32.totalorder %s23, 0
      %p65 = por %p63, %p64
      %p66 = scmp.ne.s32.totalorder %s54, %s55
      %p67 = scmp.eq.s32.totalorder %s24, 1
      %p68 = por %p66, %p67
      %p70 = scmp.ne.s32.totalorder %s55, %s69
      %p71 = scmp.eq.s32.totalorder %s24, 0
      %p72 = por %p70, %p71
      %s74 = sadd.s32 %s73, 1
      %p77 = scmp.eq.s32.totalorder %s18, 1
      %p78 = scmp.ne.s32.totalorder %s73, %s75
      %p79 = scmp.eq.s32.totalorder %s18, 0
      %p80 = por %p78, %p79
      %p81 = scmp.ne.s32.totalorder %s73, %s75
      %p82 = scmp.eq.s32.totalorder %s23, 1
      %p83 = por %p81, %p82
      %p84 = scmp.ne.s32.totalorder %s75, %s76
      %p85 = scmp.eq.s32.totalorder %s23, 0
      %p86 = por %p84, %p85
      %p87 = scmp.ne.s32.totalorder %s75, %s76
      %p88 = scmp.eq.s32.totalorder %s24, 1
      %p89 = por %p87, %p88
      %p91 = scmp.ne.s32.totalorder %s76, %s90
      %p92 = scmp.eq.s32.totalorder %s24, 0
      %p93 = por %p91, %p92
      %s95 = sadd.s32 %s94, 1
      %p98 = scmp.eq.s32.totalorder %s18, 1
      %p99 = scmp.ne.s32.totalorder %s94, %s96
      %p100 = scmp.eq.s32.totalorder %s18, 0
      %p101 = por %p99, %p100
      %p102 = scmp.ne.s32.totalorder %s94, %s96
      %p103 = scmp.eq.s32.totalorder %s23, 1
      %p104 = por %p102, %p103
      %p105 = scmp.ne.s32.totalorder %s96, %s97
      %p106 = scmp.eq.s32.totalorder %s23, 0
      %p107 = por %p105, %p106
      %p108 = scmp.ne.s32.totalorder %s96, %s97
      %p109 = scmp.eq.s32.totalorder %s24, 1
      %p110 = por %p108, %p109
      %p112 = scmp.ne.s32.totalorder %s97, %s111
      %p113 = scmp.eq.s32.totalorder %s24, 0
      %p114 = por %p112, %p113
      %s116 = sadd.s32 %s115, 1
      %p119 = scmp.eq.s32.totalorder %s18, 1
      %p120 = scmp.ne.s32.totalorder %s115, %s117
      %p121 = scmp.eq.s32.totalorder %s18, 0
      %p122 = por %p120, %p121
      %p123 = scmp.ne.s32.totalorder %s115, %s117
      %p124 = scmp.eq.s32.totalorder %s23, 1
      %p125 = por %p123, %p124
      %p126 = scmp.ne.s32.totalorder %s117, %s118
      %p127 = scmp.eq.s32.totalorder %s23, 0
      %p128 = por %p126, %p127
      %p129 = scmp.ne.s32.totalorder %s117, %s118
      %p130 = scmp.eq.s32.totalorder %s24, 1
      %p131 = por %p129, %p130
      %p133 = scmp.ne.s32.totalorder %s118, %s132
      %p134 = scmp.eq.s32.totalorder %s24, 0
      %p135 = por %p133, %p134
      %s137 = sadd.s32 %s136, 1
      %p140 = scmp.eq.s32.totalorder %s18, 1
      %p141 = scmp.ne.s32.totalorder %s136, %s138
      %p142 = scmp.eq.s32.totalorder %s18, 0
      %p143 = por %p141, %p142
      %p144 = scmp.ne.s32.totalorder %s136, %s138
      %p145 = scmp.eq.s32.totalorder %s23, 1
      %p146 = por %p144, %p145
      %p147 = scmp.ne.s32.totalorder %s138, %s139
      %p148 = scmp.eq.s32.totalorder %s23, 0
      %p149 = por %p147, %p148
      %p150 = scmp.ne.s32.totalorder %s138, %s139
      %p151 = scmp.eq.s32.totalorder %s24, 1
      %p152 = por %p150, %p151
      %p154 = scmp.ne.s32.totalorder %s139, %s153
      %p155 = scmp.eq.s32.totalorder %s24, 0
      %p156 = por %p154, %p155
      %s157 = ssub.s32 %s18, %s25
      %p158 = scmp.eq.s32.totalorder %s157, 0
      %s160 = sadd.s32 %s159, 1
      %s161 = scalar_select %p158, %s159, %s160
      %p164 = pneg %p158
      %p165 = scmp.eq.s32.totalorder %s18, 1
      %p166 = por %p164, %p165
      %p167 = scmp.ne.s32.totalorder %s159, %s162
      %p168 = scmp.eq.s32.totalorder %s18, 0
      %p169 = por %p167, %p168
      %p170 = scmp.ne.s32.totalorder %s159, %s162
      %p171 = scmp.eq.s32.totalorder %s23, 1
      %p172 = por %p170, %p171
      %p173 = scmp.ne.s32.totalorder %s162, %s163
      %p174 = scmp.eq.s32.totalorder %s23, 0
      %p175 = por %p173, %p174
      %p176 = scmp.ne.s32.totalorder %s162, %s163
      %p177 = scmp.eq.s32.totalorder %s24, 1
      %p178 = por %p176, %p177
      %p180 = scmp.ne.s32.totalorder %s163, %s179
      %p181 = scmp.eq.s32.totalorder %s24, 0
      %p182 = por %p180, %p181
      %p183 = scmp.le.s32.totalorder 1, %s18
      %p184 = scmp.lt.s32.totalorder %s18, 3
      %p185 = pnand %p183, %p184
      %p186 = pneg %p185
      // Predicated region
      $region9: #{tpu_custom_call.1} parent=5 // pred_check
        _
      $region10: #{tpu_custom_call.1} parent=5 // pred_check_branch
        %188 = sbr.rel (%p185) target = $region12
      $region11: #{tpu_custom_call.1} parent=5 // pred_region
        %s189 = ssub.s32 %s18, 1
        // Predicated region
        $region13: #{tpu_custom_call.1} parent=11 // pred_check
          %p190 = pneg %p65
        $region14: #{tpu_custom_call.1} parent=11 // pred_check_branch
          %192 = sbr.rel (%p190) target = $region16
        $region15: #{tpu_custom_call.1} parent=11 // pred_region
          _
        $region16: #{tpu_custom_call.1} parent=11 // pred_fallthru
          _
        // Predicated region
        $region17: #{tpu_custom_call.1} parent=11 // pred_check
          %p193 = pneg %p86
        $region18: #{tpu_custom_call.1} parent=11 // pred_check_branch
          %195 = sbr.rel (%p193) target = $region20
        $region19: #{tpu_custom_call.1} parent=11 // pred_region
          _
        $region20: #{tpu_custom_call.1} parent=11 // pred_fallthru
          _
        // Predicated region
        $region21: #{tpu_custom_call.1} parent=11 // pred_check
          %p196 = pneg %p107
        $region22: #{tpu_custom_call.1} parent=11 // pred_check_branch
          %198 = sbr.rel (%p196) target = $region24
        $region23: #{tpu_custom_call.1} parent=11 // pred_region
          _
        $region24: #{tpu_custom_call.1} parent=11 // pred_fallthru
          _
        // Predicated region
        $region25: #{tpu_custom_call.1} parent=11 // pred_check
          %p199 = pneg %p128
        $region26: #{tpu_custom_call.1} parent=11 // pred_check_branch
          %201 = sbr.rel (%p199) target = $region28
        $region27: #{tpu_custom_call.1} parent=11 // pred_region
          _
        $region28: #{tpu_custom_call.1} parent=11 // pred_fallthru
          _
        // Predicated region
        $region29: #{tpu_custom_call.1} parent=11 // pred_check
          %p202 = pneg %p149
        $region30: #{tpu_custom_call.1} parent=11 // pred_check_branch
          %204 = sbr.rel (%p202) target = $region32
        $region31: #{tpu_custom_call.1} parent=11 // pred_region
          _
        $region32: #{tpu_custom_call.1} parent=11 // pred_fallthru
          _
      $region12: #{tpu_custom_call.1} parent=5 // pred_fallthru
        _
      %p205 = scmp.lt.s32.totalorder %s18, 2
      // Predicated region
      $region33: #{tpu_custom_call.1} parent=5 // pred_check
        %p206 = pneg %p205
      $region34: #{tpu_custom_call.1} parent=5 // pred_check_branch
        %208 = sbr.rel (%p206) target = $region36
      $region35: #{tpu_custom_call.1} parent=5 // pred_region
        // Predicated region
        $region37: #{tpu_custom_call.1} parent=35 // pred_check
          %p209 = pneg %p38
        $region38: #{tpu_custom_call.1} parent=35 // pred_check_branch
          %211 = sbr.rel (%p209) target = $region40
        $region39: #{tpu_custom_call.1} parent=35 // pred_region
          %s212 = sand.u32 %s28, 1
          %s213 = scalar_lea.sflag [#allocation5], %s212
          %s214 = sand.u32 %s28, 1
          %s215 = smul.addr %s214, 8
          %s216 = scalar_lea.vmem [#allocation4], %s215
          %s218 = ssub.s32 128, 128
          %219 = vsyncadd %s213, %s218
          %s220 = smul.addr %s18, 2
          %s221 = smul.addr %s220, 64
          %s222 = scalar_lea.hbm %s0, %s221
          %s224 = sshll.u32 %s216, 4
          %s225 = int_to_ptr.vmem [resolvable:$true] %s224
          %227 = dma.hbm_to_vmem [thread:$0]  %s222, 128, %s225, %s213
        $region40: #{tpu_custom_call.1} parent=35 // pred_fallthru
          _
      $region36: #{tpu_custom_call.1} parent=5 // pred_fallthru
        _
      %p228 = scmp.le.s32.totalorder 1, %s18
      %p229 = scmp.lt.s32.totalorder %s18, 3
      %p230 = pnand %p228, %p229
      %p231 = pneg %p230
      // Predicated region
      $region41: #{tpu_custom_call.1} parent=5 // pred_check
        _
      $region42: #{tpu_custom_call.1} parent=5 // pred_check_branch
        %233 = sbr.rel (%p230) target = $region44
      $region43: #{tpu_custom_call.1} parent=5 // pred_region
        %s234 = ssub.s32 %s18, 1
        %s235 = sand.u32 %s31, 1
        %s236 = scalar_lea.sflag [#allocation5], %s235
        %s237 = sand.u32 %s31, 1
        %s238 = smul.addr %s237, 8
        %s239 = scalar_lea.vmem [#allocation4], %s238
        // Predicated region
        $region45: #{tpu_custom_call.1} parent=43 // pred_check
          %p240 = pneg %p44
        $region46: #{tpu_custom_call.1} parent=43 // pred_check_branch
          %242 = sbr.rel (%p240) target = $region48
        $region47: #{tpu_custom_call.1} parent=43 // pred_region
          %243 = dma.done %s236, 128
        $region48: #{tpu_custom_call.1} parent=43 // pred_fallthru
          _
        %s244 = sand.u32 %s31, 1
        %s245 = scalar_lea.sflag [#allocation5], %s244
        %s246 = sand.u32 %s31, 1
        %s247 = smul.addr %s246, 8
        %s248 = scalar_lea.vmem [#allocation4], %s247
        %p249 = pneg %p44
        %p250 = pneg %p41
        %p251 = pneg %p65
        %p252 = pneg %p62
        %p253 = pneg %p86
        %p254 = pneg %p83
        %p255 = pneg %p107
        %p256 = pneg %p104
        %p257 = pneg %p128
        %p258 = pneg %p125
        %p259 = pneg %p149
        %p260 = pneg %p146
        %p261 = pneg %p175
        %p262 = pneg %p172
        %s263 = sand.u32 %s162, 1
        %s264 = scalar_lea.sflag [#allocation6], %s263
        %s265 = sand.u32 %s162, 1
        %s266 = smul.addr %s265, 8
        %s267 = scalar_lea.vmem [#allocation7], %s266
        %v268 = vld [vmem:[%s1] sm:$0x3]
        %269 = vst [vmem:[#allocation2] sm:$0xff] 0.0
        %vm270 = vcmask 273408
        %271 = vst.msk [vmem:[#allocation2 + $0x8] sm:$0xf] %vm270, 0.0
        %v272 = vld [vmem:[%s239] sm:$0xff]
        %274 = vrot.lane.b32.xlu0 %v272, 17
        %v275 = vpop.permute.xlu0 %274
        %v276 = vrot.slane %v275, 4
        %vm277 = vcmask 138240
        %v278 = vsel %vm277, %v276, %v275
        %vm281 = vcmask 1043592
        %vm282 = vcmask 1047556
        %vm283 = vmor %vm282, %vm281
        %284 = vst.msk [vmem:[#allocation2] sm:$0xff] %vm283, %v278
        %vm285 = vcmask 134144
        %286 = vst.msk [vmem:[#allocation2 + $0x8] sm:$0xf] %vm285, %v276
        %v287 = vld [vmem:[#allocation2] sm:$0xff]
        %vm288 = vcmp.ge.s32.totalorder %v268, 1
        %v289 = vsel %vm288, 1, 0
        %v290 = vlaneseq
        %v291 = vshrl.u32 %v290, 7
        %v292 = vsub.s32 0, %v291
        %v293 = vrot.slane %v289, %v292
        %v294 = vlaneseq
        %v295 = vshrl.u32 %v294, 7
        %v296 = vsub.s32 1, %v295
        %v297 = vrot.slane %v289, %v296
        %vm298 = vcmp.eq.s32.totalorder %v293, 1
        %vm299 = vcmp.eq.s32.totalorder %v297, 1
        %v301 = vcombine.high %v287, %v287
        %v303 = vsel %vm298, %v287, 0.0
        %v304 = vsel %vm299, %v301, 0.0
        %305 = vst [vmem:[#allocation3] sm:$0xf] %v303
        %306 = vst [vmem:[#allocation3 + $0x8] sm:$0xf] %v304
        %v307 = vld [vmem:[#allocation2] sm:$0xff]
        %v308 = vld [vmem:[#allocation2 + $0x8] sm:$0xf]
        %v311 = vcombine.low %v307, %v307
        %v312 = vcombine.low %v308, %v308
        %313 = vrot.lane.b32.xlu0 %v311, 127
        %v314 = vpop.permute.xlu0 %313
        %315 = vrot.lane.b32.xlu0 %v307, 127
        %v316 = vpop.permute.xlu0 %315
        %317 = vrot.lane.b32.xlu0 %v312, 127
        %v318 = vpop.permute.xlu0 %317
        %vm319 = vcmask 1039360
        %v320 = vsel %vm319, %v314, %v316
        %v321 = vsel %vm319, %v316, %v318
        %324 = vst [vmem:[#allocation3] sm:$0xf0] %v320
        %325 = vst [vmem:[#allocation3 + $0x8] sm:$0xf0] %v321
        %v326 = vld [vmem:[#allocation2] sm:$0xff]
        %v327 = vld [vmem:[#allocation2 + $0x8] sm:$0xf]
        %vm328 = vcmp.lt.s32.totalorder %v268, 15
        %v329 = vsel %vm328, 1, 0
        %v330 = vlaneseq
        %v331 = vshrl.u32 %v330, 7
        %v332 = vsub.s32 0, %v331
        %v333 = vrot.slane %v329, %v332
        %v334 = vlaneseq
        %v335 = vshrl.u32 %v334, 7
        %v336 = vsub.s32 1, %v335
        %v337 = vrot.slane %v329, %v336
        %vm338 = vcmp.eq.s32.totalorder %v333, 1
        %vm339 = vcmp.eq.s32.totalorder %v337, 1
        %v342 = vcombine.high %v326, %v326
        %343 = vrot.lane.b32.xlu0 %v326, 126
        %v344 = vpop.permute.xlu0 %343
        %345 = vrot.lane.b32.xlu0 %v342, 126
        %v346 = vpop.permute.xlu0 %345
        %347 = vrot.lane.b32.xlu0 %v327, 126
        %v348 = vpop.permute.xlu0 %347
        %vm349 = vcmask 1031168
        %v350 = vsel %vm349, %v344, %v346
        %v351 = vsel %vm349, %v346, %v348
        %v354 = vsel %vm338, %v350, 0.0
        %v355 = vsel %vm339, %v351, 0.0
        %356 = vst [vmem:[#allocation3 + $0x10] sm:$0xf] %v354
        %357 = vst [vmem:[#allocation3 + $0x18] sm:$0xf] %v355
        %v358 = vld [vmem:[#allocation2] sm:$0xff]
        %v359 = vld [vmem:[#allocation2 + $0x8] sm:$0xf]
        %v362 = vcombine.high %v358, %v358
        %363 = vrot.lane.b32.xlu0 %v358, 112
        %v364 = vpop.permute.xlu0 %363
        %365 = vrot.lane.b32.xlu0 %v362, 112
        %v366 = vpop.permute.xlu0 %365
        %367 = vrot.lane.b32.xlu0 %v359, 112
        %v368 = vpop.permute.xlu0 %367
        %vm369 = vcmask 916480
        %v370 = vsel %vm369, %v364, %v366
        %v371 = vsel %vm369, %v366, %v368
        %v374 = vsel %vm298, %v370, 0.0
        %v375 = vsel %vm299, %v371, 0.0
        %v378 = vrot.slane %v374, 4
        %v379 = vrot.slane %v375, 4
        %382 = vst [vmem:[#allocation3 + $0x10] sm:$0xf0] %v378
        %383 = vst [vmem:[#allocation3 + $0x18] sm:$0xf0] %v379
        %v384 = vld [vmem:[#allocation2] sm:$0xff]
        %v385 = vld [vmem:[#allocation2 + $0x8] sm:$0xf]
        %v388 = vcombine.high %v384, %v384
        %389 = vrot.lane.b32.xlu0 %v384, 111
        %v390 = vpop.permute.xlu0 %389
        %391 = vrot.lane.b32.xlu0 %v388, 111
        %v392 = vpop.permute.xlu0 %391
        %393 = vrot.lane.b32.xlu0 %v385, 111
        %v394 = vpop.permute.xlu0 %393
        %vm395 = vcmask 908288
        %v396 = vsel %vm395, %v390, %v392
        %v397 = vsel %vm395, %v392, %v394
        %400 = vst [vmem:[#allocation3 + $0x20] sm:$0xf] %v396
        %401 = vst [vmem:[#allocation3 + $0x28] sm:$0xf] %v397
        %v402 = vld [vmem:[#allocation2] sm:$0xff]
        %v403 = vld [vmem:[#allocation2 + $0x8] sm:$0xf]
        %v406 = vcombine.high %v402, %v402
        %407 = vrot.lane.b32.xlu0 %v402, 110
        %v408 = vpop.permute.xlu0 %407
        %409 = vrot.lane.b32.xlu0 %v406, 110
        %v410 = vpop.permute.xlu0 %409
        %411 = vrot.lane.b32.xlu0 %v403, 110
        %v412 = vpop.permute.xlu0 %411
        %vm413 = vcmask 900096
        %v414 = vsel %vm413, %v408, %v410
        %v415 = vsel %vm413, %v410, %v412
        %v418 = vsel %vm338, %v414, 0.0
        %v419 = vsel %vm339, %v415, 0.0
        %v422 = vrot.slane %v418, 4
        %v423 = vrot.slane %v419, 4
        %426 = vst [vmem:[#allocation3 + $0x20] sm:$0xf0] %v422
        %427 = vst [vmem:[#allocation3 + $0x28] sm:$0xf0] %v423
        %v428 = vld [vmem:[#allocation2] sm:$0xff]
        %v429 = vld [vmem:[#allocation2 + $0x8] sm:$0xf]
        %v432 = vcombine.high %v428, %v428
        %433 = vrot.lane.b32.xlu0 %v428, 96
        %v434 = vpop.permute.xlu0 %433
        %435 = vrot.lane.b32.xlu0 %v432, 96
        %v436 = vpop.permute.xlu0 %435
        %437 = vrot.lane.b32.xlu0 %v429, 96
        %v438 = vpop.permute.xlu0 %437
        %vm439 = vcmask 785408
        %v440 = vsel %vm439, %v434, %v436
        %v441 = vsel %vm439, %v436, %v438
        %v444 = vsel %vm298, %v440, 0.0
        %v445 = vsel %vm299, %v441, 0.0
        %446 = vst [vmem:[#allocation3 + $0x30] sm:$0xf] %v444
        %447 = vst [vmem:[#allocation3 + $0x38] sm:$0xf] %v445
        %v448 = vld [vmem:[#allocation2] sm:$0xff]
        %v449 = vld [vmem:[#allocation2 + $0x8] sm:$0xf]
        %v452 = vcombine.low %v448, %v448
        %v453 = vcombine.low %v449, %v449
        %454 = vrot.lane.b32.xlu0 %v452, 95
        %v455 = vpop.permute.xlu0 %454
        %456 = vrot.lane.b32.xlu0 %v448, 95
        %v457 = vpop.permute.xlu0 %456
        %458 = vrot.lane.b32.xlu0 %v453, 95
        %v459 = vpop.permute.xlu0 %458
        %vm460 = vcmask 777216
        %v461 = vsel %vm460, %v455, %v457
        %v462 = vsel %vm460, %v457, %v459
        %465 = vst [vmem:[#allocation3 + $0x30] sm:$0xf0] %v461
        %466 = vst [vmem:[#allocation3 + $0x38] sm:$0xf0] %v462
        %v467 = vld [vmem:[#allocation2] sm:$0xff]
        %v468 = vld [vmem:[#allocation2 + $0x8] sm:$0xf]
        %v471 = vcombine.high %v467, %v467
        %472 = vrot.lane.b32.xlu0 %v467, 94
        %v473 = vpop.permute.xlu0 %472
        %474 = vrot.lane.b32.xlu0 %v471, 94
        %v475 = vpop.permute.xlu0 %474
        %476 = vrot.lane.b32.xlu0 %v468, 94
        %v477 = vpop.permute.xlu0 %476
        %vm478 = vcmask 769024
        %v479 = vsel %vm478, %v473, %v475
        %v480 = vsel %vm478, %v475, %v477
        %v483 = vsel %vm338, %v479, 0.0
        %v484 = vsel %vm339, %v480, 0.0
        %485 = vst [vmem:[#allocation3 + $0x40] sm:$0xf] %v483
        %486 = vst [vmem:[#allocation3 + $0x48] sm:$0xf] %v484
        %v487 = vld [vmem:[#allocation3] sm:$0xff]
        %v488 = vld [vmem:[#allocation3 + $0x8] sm:$0xff]
        %v489 = vld [vmem:[#allocation3 + $0x10] sm:$0xff]
        %v490 = vld [vmem:[#allocation3 + $0x18] sm:$0xff]
        %v491 = vld [vmem:[#allocation3 + $0x20] sm:$0xff]
        %v492 = vld [vmem:[#allocation3 + $0x28] sm:$0xff]
        %v493 = vld [vmem:[#allocation3 + $0x30] sm:$0xff]
        %v494 = vld [vmem:[#allocation3 + $0x38] sm:$0xff]
        %v495 = vld [vmem:[#allocation3 + $0x40] sm:$0xf]
        %v496 = vld [vmem:[#allocation3 + $0x48] sm:$0xf]
        %v497 = vld [vmem:[%s2] sm:$0xf]
        %v498 = vld [vmem:[%s3] sm:$0xf]
        %500 = vset.pattern.permute.xlu0 0
        %501 = vperm.xlu0 %500, %v498
        %v502 = vpop.permute.xlu0 %501
        %vm504 = vcmask 293888
        %v506 = vsel %vm504, %v497, 0
        %vm508 = vcmask 1043456
        %v510 = vsel %vm508, %v495, 0
        %v513 = vsel %vm508, %v496, 0
        %515 = vmatprep.subr.mxu0 %v488
        %516 = vmatpush1.msra.mxu0 %v487
        %517 = vmatprep.subr.mxu0 %v490
        %518 = vmatpush1.msra.mxu0 %v489
        %519 = vmatprep.subr.mxu0 %v492
        %520 = vmatpush1.msra.mxu0 %v491
        %521 = vmatprep.subr.mxu0 %v494
        %522 = vmatpush1.msra.mxu0 %v493
        %523 = vmatprep.subr.mxu0 %v513
        %524 = vmatpush1.msra.mxu0 %v510
        %525 = vmatprep.subr.mxu0 0.0
        %526 = vmatpush1.msra.mxu0 0.0
        %527 = vmatprep.subr.mxu0 0.0
        %528 = vmatpush1.msra.mxu0 0.0
        %529 = vmatprep.subr.mxu0 0.0
        %530 = vmatpush1.msra.mxu0 0.0
        %531 = vmatprep.subr.mxu0 0.0
        %532 = vmatpush1.msra.mxu0 0.0
        %533 = vmatprep.subr.mxu0 0.0
        %534 = vmatpush1.msra.mxu0 0.0
        %535 = vmatprep.subr.mxu0 0.0
        %536 = vmatpush1.msra.mxu0 0.0
        %537 = vmatprep.subr.mxu0 0.0
        %538 = vmatpush1.msra.mxu0 0.0
        %539 = vmatprep.subr.mxu0 0.0
        %540 = vmatpush1.msra.mxu0 0.0
        %541 = vmatprep.subr.mxu0 0.0
        %542 = vmatpush1.msra.mxu0 0.0
        %543 = vmatprep.subr.mxu0 0.0
        %544 = vmatpush1.msra.mxu0 0.0
        %545 = vmatprep.subr.mxu0 0.0
        %546 = vmatpush1.msra.mxu0 0.0
        %547 = vmatprep.subr.mxu0 0.0
        %548 = vmatpush1.msra.mxu0 0.0
        %549 = vmatprep.subr.mxu0 0.0
        %550 = vmatpush1.msra.mxu0 0.0
        %551 = vmatprep.subr.mxu0 0.0
        %552 = vmatpush1.msra.mxu0 0.0
        %553 = vmatprep.subr.mxu0 0.0
        %554 = vmatpush1.msra.mxu0 0.0
        %555 = vmatprep.subr.mxu0 0.0
        %556 = vmatpush1.msra.mxu0 0.0
        %557 = vmatprep.subr.mxu0 0.0
        %558 = vmatpush1.msra.mxu0 0.0
        %559 = vmatprep.subr.mxu0 0.0
        %560 = vmatpush1.msra.mxu0 0.0
        %561 = vmatprep.subr.mxu0 0.0
        %562 = vmatpush1.msra.mxu0 0.0
        %563 = vmatprep.subr.mxu0 0.0
        %564 = vmatpush1.msra.mxu0 0.0
        %565 = vmatprep.subr.mxu0 0.0
        %566 = vmatpush1.msra.mxu0 0.0
        %567 = vmatprep.subr.mxu0 0.0
        %568 = vmatpush1.msra.mxu0 0.0
        %569 = vmatprep.subr.mxu0 0.0
        %570 = vmatpush1.msra.mxu0 0.0
        %571 = vmatprep.subr.mxu0 0.0
        %572 = vmatpush1.msra.mxu0 0.0
        %573 = vmatprep.subr.mxu0 0.0
        %574 = vmatpush1.msra.mxu0 0.0
        %575 = vmatprep.subr.mxu0 0.0
        %576 = vmatpush1.msra.mxu0 0.0
        %577 = vmatprep.subr.mxu0 0.0
        %578 = vmatpush1.msra.mxu0 0.0
        %579 = vmatprep.mubr.f32.mxu0 0.0
        %580 = vmatmul.mubr.f32.gmra.mrb[0].mxu0 %v506
        %v581 = vpop.f32.mrb[0].mxu0
        %v582 = vadd.f32 %v502, %v581
        %v583 = vpop.f32.mrb[0].mxu0
        %v584 = vadd.f32 %v502, %v583
        %585 = vdwg.mxu0
        %v586 = vmax.f32 %v582, 0.0
        %v587 = vmax.f32 %v584, 0.0
        %v588 = vmin.f32 %v586, 6.0
        %v589 = vmin.f32 %v587, 6.0
        %v592 = vcombine.low %v588, %v589
        %593 = vrot.lane.b32.xlu0 %v592, 17
        %v594 = vpop.permute.xlu0 %593
        %v595 = vrot.slane %v594, 4
        %v596 = vsel %vm277, %v595, %v594
        %599 = vst.msk [vmem:[#allocation2] sm:$0xff] %vm283, %v596
        %600 = vst.msk [vmem:[#allocation2 + $0x8] sm:$0xf] %vm285, %v595
        %v601 = vld [vmem:[#allocation2] sm:$0xff]
        %v603 = vcombine.high %v601, %v601
        %v605 = vsel %vm298, %v601, 0.0
        %v606 = vsel %vm299, %v603, 0.0
        %607 = vst [vmem:[#allocation3] sm:$0xf] %v605
        %608 = vst [vmem:[#allocation3 + $0x8] sm:$0xf] %v606
        %v609 = vld [vmem:[#allocation2] sm:$0xff]
        %v610 = vld [vmem:[#allocation2 + $0x8] sm:$0xf]
        %v613 = vcombine.low %v609, %v609
        %v614 = vcombine.low %v610, %v610
        %615 = vrot.lane.b32.xlu0 %v613, 127
        %v616 = vpop.permute.xlu0 %615
        %617 = vrot.lane.b32.xlu0 %v609, 127
        %v618 = vpop.permute.xlu0 %617
        %619 = vrot.lane.b32.xlu0 %v614, 127
        %v620 = vpop.permute.xlu0 %619
        %v621 = vsel %vm319, %v616, %v618
        %v622 = vsel %vm319, %v618, %v620
        %625 = vst [vmem:[#allocation3] sm:$0xf0] %v621
        %626 = vst [vmem:[#allocation3 + $0x8] sm:$0xf0] %v622
        %v627 = vld [vmem:[#allocation2] sm:$0xff]
        %v628 = vld [vmem:[#allocation2 + $0x8] sm:$0xf]
        %v631 = vcombine.high %v627, %v627
        %632 = vrot.lane.b32.xlu0 %v627, 126
        %v633 = vpop.permute.xlu0 %632
        %634 = vrot.lane.b32.xlu0 %v631, 126
        %v635 = vpop.permute.xlu0 %634
        %636 = vrot.lane.b32.xlu0 %v628, 126
        %v637 = vpop.permute.xlu0 %636
        %v638 = vsel %vm349, %v633, %v635
        %v639 = vsel %vm349, %v635, %v637
        %v642 = vsel %vm338, %v638, 0.0
        %v643 = vsel %vm339, %v639, 0.0
        %644 = vst [vmem:[#allocation3 + $0x10] sm:$0xf] %v642
        %645 = vst [vmem:[#allocation3 + $0x18] sm:$0xf] %v643
        %v646 = vld [vmem:[#allocation2] sm:$0xff]
        %v647 = vld [vmem:[#allocation2 + $0x8] sm:$0xf]
        %v650 = vcombine.high %v646, %v646
        %651 = vrot.lane.b32.xlu0 %v646, 112
        %v652 = vpop.permute.xlu0 %651
        %653 = vrot.lane.b32.xlu0 %v650, 112
        %v654 = vpop.permute.xlu0 %653
        %655 = vrot.lane.b32.xlu0 %v647, 112
        %v656 = vpop.permute.xlu0 %655
        %v657 = vsel %vm369, %v652, %v654
        %v658 = vsel %vm369, %v654, %v656
        %v661 = vsel %vm298, %v657, 0.0
        %v662 = vsel %vm299, %v658, 0.0
        %v665 = vrot.slane %v661, 4
        %v666 = vrot.slane %v662, 4
        %669 = vst [vmem:[#allocation3 + $0x10] sm:$0xf0] %v665
        %670 = vst [vmem:[#allocation3 + $0x18] sm:$0xf0] %v666
        %v671 = vld [vmem:[#allocation2] sm:$0xff]
        %v672 = vld [vmem:[#allocation2 + $0x8] sm:$0xf]
        %v675 = vcombine.high %v671, %v671
        %676 = vrot.lane.b32.xlu0 %v671, 111
        %v677 = vpop.permute.xlu0 %676
        %678 = vrot.lane.b32.xlu0 %v675, 111
        %v679 = vpop.permute.xlu0 %678
        %680 = vrot.lane.b32.xlu0 %v672, 111
        %v681 = vpop.permute.xlu0 %680
        %v682 = vsel %vm395, %v677, %v679
        %v683 = vsel %vm395, %v679, %v681
        %686 = vst [vmem:[#allocation3 + $0x20] sm:$0xf] %v682
        %687 = vst [vmem:[#allocation3 + $0x28] sm:$0xf] %v683
        %v688 = vld [vmem:[#allocation2] sm:$0xff]
        %v689 = vld [vmem:[#allocation2 + $0x8] sm:$0xf]
        %v692 = vcombine.high %v688, %v688
        %693 = vrot.lane.b32.xlu0 %v688, 110
        %v694 = vpop.permute.xlu0 %693
        %695 = vrot.lane.b32.xlu0 %v692, 110
        %v696 = vpop.permute.xlu0 %695
        %697 = vrot.lane.b32.xlu0 %v689, 110
        %v698 = vpop.permute.xlu0 %697
        %v699 = vsel %vm413, %v694, %v696
        %v700 = vsel %vm413, %v696, %v698
        %v703 = vsel %vm338, %v699, 0.0
        %v704 = vsel %vm339, %v700, 0.0
        %v707 = vrot.slane %v703, 4
        %v708 = vrot.slane %v704, 4
        %711 = vst [vmem:[#allocation3 + $0x20] sm:$0xf0] %v707
        %712 = vst [vmem:[#allocation3 + $0x28] sm:$0xf0] %v708
        %v713 = vld [vmem:[#allocation2] sm:$0xff]
        %v714 = vld [vmem:[#allocation2 + $0x8] sm:$0xf]
        %v717 = vcombine.high %v713, %v713
        %718 = vrot.lane.b32.xlu0 %v713, 96
        %v719 = vpop.permute.xlu0 %718
        %720 = vrot.lane.b32.xlu0 %v717, 96
        %v721 = vpop.permute.xlu0 %720
        %722 = vrot.lane.b32.xlu0 %v714, 96
        %v723 = vpop.permute.xlu0 %722
        %v724 = vsel %vm439, %v719, %v721
        %v725 = vsel %vm439, %v721, %v723
        %v728 = vsel %vm298, %v724, 0.0
        %v729 = vsel %vm299, %v725, 0.0
        %730 = vst [vmem:[#allocation3 + $0x30] sm:$0xf] %v728
        %731 = vst [vmem:[#allocation3 + $0x38] sm:$0xf] %v729
        %v732 = vld [vmem:[#allocation2] sm:$0xff]
        %v733 = vld [vmem:[#allocation2 + $0x8] sm:$0xf]
        %v736 = vcombine.low %v732, %v732
        %v737 = vcombine.low %v733, %v733
        %738 = vrot.lane.b32.xlu0 %v736, 95
        %v739 = vpop.permute.xlu0 %738
        %740 = vrot.lane.b32.xlu0 %v732, 95
        %v741 = vpop.permute.xlu0 %740
        %742 = vrot.lane.b32.xlu0 %v737, 95
        %v743 = vpop.permute.xlu0 %742
        %v744 = vsel %vm460, %v739, %v741
        %v745 = vsel %vm460, %v741, %v743
        %748 = vst [vmem:[#allocation3 + $0x30] sm:$0xf0] %v744
        %749 = vst [vmem:[#allocation3 + $0x38] sm:$0xf0] %v745
        %v750 = vld [vmem:[#allocation2] sm:$0xff]
        %v751 = vld [vmem:[#allocation2 + $0x8] sm:$0xf]
        %v754 = vcombine.high %v750, %v750
        %755 = vrot.lane.b32.xlu0 %v750, 94
        %v756 = vpop.permute.xlu0 %755
        %757 = vrot.lane.b32.xlu0 %v754, 94
        %v758 = vpop.permute.xlu0 %757
        %759 = vrot.lane.b32.xlu0 %v751, 94
        %v760 = vpop.permute.xlu0 %759
        %v761 = vsel %vm478, %v756, %v758
        %v762 = vsel %vm478, %v758, %v760
        %v765 = vsel %vm338, %v761, 0.0
        %v766 = vsel %vm339, %v762, 0.0
        %767 = vst [vmem:[#allocation3 + $0x40] sm:$0xf] %v765
        %768 = vst [vmem:[#allocation3 + $0x48] sm:$0xf] %v766
        %v769 = vld [vmem:[#allocation3] sm:$0xff]
        %v770 = vld [vmem:[#allocation3 + $0x8] sm:$0xff]
        %v771 = vld [vmem:[#allocation3 + $0x10] sm:$0xff]
        %v772 = vld [vmem:[#allocation3 + $0x18] sm:$0xff]
        %v773 = vld [vmem:[#allocation3 + $0x20] sm:$0xff]
        %v774 = vld [vmem:[#allocation3 + $0x28] sm:$0xff]
        %v775 = vld [vmem:[#allocation3 + $0x30] sm:$0xff]
        %v776 = vld [vmem:[#allocation3 + $0x38] sm:$0xff]
        %v777 = vld [vmem:[#allocation3 + $0x40] sm:$0xf]
        %v778 = vld [vmem:[#allocation3 + $0x48] sm:$0xf]
        %v779 = vld [vmem:[%s4] sm:$0xf]
        %v780 = vld [vmem:[%s5] sm:$0xf]
        %782 = vset.pattern.permute.xlu0 0
        %783 = vperm.xlu0 %782, %v780
        %v784 = vpop.permute.xlu0 %783
        %v787 = vsel %vm504, %v779, 0
        %v790 = vsel %vm508, %v777, 0
        %v793 = vsel %vm508, %v778, 0
        %795 = vmatprep.subr.mxu0 %v770
        %796 = vmatpush1.msra.mxu0 %v769
        %797 = vmatprep.subr.mxu0 %v772
        %798 = vmatpush1.msra.mxu0 %v771
        %799 = vmatprep.subr.mxu0 %v774
        %800 = vmatpush1.msra.mxu0 %v773
        %801 = vmatprep.subr.mxu0 %v776
        %802 = vmatpush1.msra.mxu0 %v775
        %803 = vmatprep.subr.mxu0 %v793
        %804 = vmatpush1.msra.mxu0 %v790
        %805 = vmatprep.subr.mxu0 0.0
        %806 = vmatpush1.msra.mxu0 0.0
        %807 = vmatprep.subr.mxu0 0.0
        %808 = vmatpush1.msra.mxu0 0.0
        %809 = vmatprep.subr.mxu0 0.0
        %810 = vmatpush1.msra.mxu0 0.0
        %811 = vmatprep.subr.mxu0 0.0
        %812 = vmatpush1.msra.mxu0 0.0
        %813 = vmatprep.subr.mxu0 0.0
        %814 = vmatpush1.msra.mxu0 0.0
        %815 = vmatprep.subr.mxu0 0.0
        %816 = vmatpush1.msra.mxu0 0.0
        %817 = vmatprep.subr.mxu0 0.0
        %818 = vmatpush1.msra.mxu0 0.0
        %819 = vmatprep.subr.mxu0 0.0
        %820 = vmatpush1.msra.mxu0 0.0
        %821 = vmatprep.subr.mxu0 0.0
        %822 = vmatpush1.msra.mxu0 0.0
        %823 = vmatprep.subr.mxu0 0.0
        %824 = vmatpush1.msra.mxu0 0.0
        %825 = vmatprep.subr.mxu0 0.0
        %826 = vmatpush1.msra.mxu0 0.0
        %827 = vmatprep.subr.mxu0 0.0
        %828 = vmatpush1.msra.mxu0 0.0
        %829 = vmatprep.subr.mxu0 0.0
        %830 = vmatpush1.msra.mxu0 0.0
        %831 = vmatprep.subr.mxu0 0.0
        %832 = vmatpush1.msra.mxu0 0.0
        %833 = vmatprep.subr.mxu0 0.0
        %834 = vmatpush1.msra.mxu0 0.0
        %835 = vmatprep.subr.mxu0 0.0
        %836 = vmatpush1.msra.mxu0 0.0
        %837 = vmatprep.subr.mxu0 0.0
        %838 = vmatpush1.msra.mxu0 0.0
        %839 = vmatprep.subr.mxu0 0.0
        %840 = vmatpush1.msra.mxu0 0.0
        %841 = vmatprep.subr.mxu0 0.0
        %842 = vmatpush1.msra.mxu0 0.0
        %843 = vmatprep.subr.mxu0 0.0
        %844 = vmatpush1.msra.mxu0 0.0
        %845 = vmatprep.subr.mxu0 0.0
        %846 = vmatpush1.msra.mxu0 0.0
        %847 = vmatprep.subr.mxu0 0.0
        %848 = vmatpush1.msra.mxu0 0.0
        %849 = vmatprep.subr.mxu0 0.0
        %850 = vmatpush1.msra.mxu0 0.0
        %851 = vmatprep.subr.mxu0 0.0
        %852 = vmatpush1.msra.mxu0 0.0
        %853 = vmatprep.subr.mxu0 0.0
        %854 = vmatpush1.msra.mxu0 0.0
        %855 = vmatprep.subr.mxu0 0.0
        %856 = vmatpush1.msra.mxu0 0.0
        %857 = vmatprep.subr.mxu0 0.0
        %858 = vmatpush1.msra.mxu0 0.0
        %859 = vmatprep.mubr.f32.mxu0 0.0
        %860 = vmatmul.mubr.f32.gmra.mrb[0].mxu0 %v787
        %v861 = vpop.f32.mrb[0].mxu0
        %v862 = vadd.f32 %v784, %v861
        %v863 = vpop.f32.mrb[0].mxu0
        %v864 = vadd.f32 %v784, %v863
        %865 = vdwg.mxu0
        %v868 = vcombine.low %v862, %v864
        %870 = vst [vmem:[%s267] sm:$0xff] %v868
        %s871 = sand.u32 %s162, 1
        %s872 = scalar_lea.sflag [#allocation6], %s871
        %s873 = sand.u32 %s162, 1
        %s874 = smul.addr %s873, 8
        %s875 = scalar_lea.vmem [#allocation7], %s874
        // Predicated region
        $region49: #{tpu_custom_call.1} parent=43 // pred_check
          %p876 = pneg %p172
        $region50: #{tpu_custom_call.1} parent=43 // pred_check_branch
          %878 = sbr.rel (%p876) target = $region52
        $region51: #{tpu_custom_call.1} parent=43 // pred_region
          %s880 = ssub.s32 128, 128
          %881 = vsyncadd %s872, %s880
          %s882 = smul.addr %s23, 2
          %s883 = smul.addr %s882, 64
          %s884 = scalar_lea.hbm %s6, %s883
          %s886 = sshll.u32 %s875, 4
          %s887 = int_to_ptr.vmem [resolvable:$true] %s886
          %889 = dma.vmem_to_hbm [thread:$0]  %s887, 128, %s884, %s872
        $region52: #{tpu_custom_call.1} parent=43 // pred_fallthru
          _
      $region44: #{tpu_custom_call.1} parent=5 // pred_fallthru
        _
      %p890 = scmp.le.s32.totalorder 2, %s18
      // Predicated region
      $region53: #{tpu_custom_call.1} parent=5 // pred_check
        %p891 = pneg %p890
      $region54: #{tpu_custom_call.1} parent=5 // pred_check_branch
        %893 = sbr.rel (%p891) target = $region56
      $region55: #{tpu_custom_call.1} parent=5 // pred_region
        %s894 = ssub.s32 %s18, 2
        // Predicated region
        $region57: #{tpu_custom_call.1} parent=55 // pred_check
          %p895 = pneg %p178
        $region58: #{tpu_custom_call.1} parent=55 // pred_check_branch
          %897 = sbr.rel (%p895) target = $region60
        $region59: #{tpu_custom_call.1} parent=55 // pred_region
          %s898 = sand.u32 %s163, 1
          %s899 = scalar_lea.sflag [#allocation6], %s898
          %s900 = sand.u32 %s163, 1
          %s901 = smul.addr %s900, 8
          %s902 = scalar_lea.vmem [#allocation7], %s901
          %903 = dma.done %s899, 128
        $region60: #{tpu_custom_call.1} parent=55 // pred_fallthru
          _
      $region56: #{tpu_custom_call.1} parent=5 // pred_fallthru
        _
    $region6: #{tpu_custom_call.1} parent=1 // loop_footer
      %s22 = sadd.s32 1, %s18
    $region7: #{tpu_custom_call.1} parent=1 // loop_footer_branch
      %17 = sbr.rel target = $region3
    $region8: #{tpu_custom_call.1} parent=1 // loop_exit
      _
    %904 = vsyncpa [#allocation5], 1
    %s905 = scalar_lea.sflag [#allocation5], 1
    %906 = vsyncpa %s905, 1
    %907 = vsyncpa [#allocation6], 1
    %s908 = scalar_lea.sflag [#allocation6], 1
    %909 = vsyncpa %s908, 1

</llo_original>
